<compile_context>
chip_gen: v6e
topology: v6e:2x2x1
jax: 0.10.0
libtpu: 0.0.40
codegen_flags: <defaults>
</compile_context>

<pallas_src>
import math
import re

import jax
import jax.numpy as jnp
from jax.experimental import pallas as pl
from jax.experimental.pallas import tpu as pltpu

_MIB = 1024 * 1024

# Numerics trade-off flag (review: keep behind a flag for strict f32 parity).
# When True and inputs are f32 on v5e+/v6e+, operands are cast to bf16 for the
# MXU (accumulation stays f32).
_ALLOW_BF16_COMPUTE_FOR_F32 = False

_NEG_BIG = -1e30  # mask value for padded key columns (exp -> 0)


def _tpu_generation():
    """Best-effort TPU generation from device_kind (e.g. 'TPU v6 lite' -> 6)."""
    try:
        kind = jax.devices()[0].device_kind
    except Exception:
        return None
    m = re.search(r"(\d+)", str(kind))
    return int(m.group(1)) if m else None


def _vmem_budget(gen):
    """(scoped vmem_limit_bytes or None, per-step tile budget in bytes)."""
    phys = None
    try:
        info = pltpu.get_tpu_info()
        phys = int(getattr(info, "vmem_capacity_bytes"))
    except Exception:
        phys = None
    if phys is None:
        if gen is None or gen <= 3:
            # Unknown / old chip: don't touch the scoped limit, stay small.
            return None, 10 * _MIB
        phys = 64 * _MIB if gen >= 7 else 128 * _MIB
    if phys <= 64 * _MIB:
        scoped = min(40 * _MIB, int(phys * 0.62))   # v7x: ~40 MiB of 64 MiB
    else:
        scoped = min(100 * _MIB, int(phys * 0.78))  # v5e/v6e: ~100 MiB of 128 MiB
    return scoped, int(scoped * 0.70)


def _choose_tile(s, target, sublane):
    """Pick a legal tile for a length-s axis.

    Returns (tile, padded_s). tile is either s itself (full-dim block, always
    legal), a sublane-aligned divisor of s, or `target` with s padded up.
    """
    if s <= target:
        return s, s
    best = 0
    t = (min(s, target) // sublane) * sublane
    while t >= sublane:
        if s % t == 0:
            best = t
            break
        t -= sublane
    if best >= 128:
        return best, s
    tile = target
    s_pad = -(-s // tile) * tile
    # Prefer an un-padded medium divisor over >25% padded work.
    if best >= 64 and (s_pad - s) * 4 > s:
        return best, s
    return tile, s_pad


def _pick_bht(bh, n_q_tiles, s, d, tq, tk, itemsize, budget):
    """How many (batch, head) slices to pack per grid step."""
    per_head_work = s * s * d
    cap = min(bh, 16) if per_head_work < (1 << 21) else min(bh, 2)
    first_fit = None
    for cand in range(cap, 0, -1):
        if bh % cand:
            continue
        io = 2 * cand * (2 * tq * d + 2 * tk * d) * itemsize      # dbl-buffered q,o,k,v
        scratch = cand * (tq * d * 4 + tq * d * itemsize + 8 * tq)  # acc + scaled-q + m/l
        work = 3 * cand * tq * tk * 4                              # s/p/exp f32 temporaries
        if io + scratch + work > budget:
            continue
        if first_fit is None:
            first_fit = cand
        # Keep at least 2 parallel grid steps so both v7x TensorCores get work.
        if (bh // cand) * n_q_tiles >= 2:
            return cand
    return first_fit if first_fit is not None else 1


def _make_flash_kernel(sm_scale, bht, d, tk, s_real_k, needs_key_mask,
                       exp_in_bf16, precise_recip):
    def kernel(q_ref, k_ref, v_ref, o_ref, m_sc, l_sc, acc_sc, qs_sc):
        kv = pl.program_id(2)

        @pl.when(kv == 0)
        def _():
            m_sc[...] = jnp.full_like(m_sc, -jnp.inf)
            l_sc[...] = jnp.zeros_like(l_sc)
            acc_sc[...] = jnp.zeros_like(acc_sc)
            # Q block is resident across the whole kv axis: hoist the softmax
            # scale out of the inner loop (done once per (bh, q-tile)).
            qs_sc[...] = (q_ref[...] * sm_scale).astype(qs_sc.dtype)

        q = qs_sc[...]                      # (BHT, TQ, D), pre-scaled
        k = k_ref[...]                      # (BHT, TK, D)
        v = v_ref[...]                      # (BHT, TK, D)

        # scores: contract last dims, batch over packed heads -> no K transpose
        s = jnp.einsum('bqd,bkd->bqk', q, k,
                       preferred_element_type=jnp.float32)        # f32

        if needs_key_mask:
            key_idx = kv * tk + jax.lax.broadcasted_iota(jnp.int32, (1, 1, tk), 2)
            s = jnp.where(key_idx < s_real_k, s, jnp.float32(_NEG_BIG))

        m_prev = m_sc[...]
        m_new = jnp.maximum(m_prev, s.max(axis=-1, keepdims=True))
        alpha = jnp.exp(m_prev - m_new)
        if exp_in_bf16:
            # bf16 EUP path (v6e/v7x); p is already in the MXU dtype.
            p = jnp.exp((s - m_new).astype(jnp.bfloat16))
        else:
            p = jnp.exp(s - m_new)
        l_sc[...] = alpha * l_sc[...] + jnp.sum(
            p, axis=-1, keepdims=True, dtype=jnp.float32)
        pv = jnp.einsum('bqk,bkd->bqd',
                        p if p.dtype == v.dtype else p.astype(v.dtype), v,
                        preferred_element_type=jnp.float32)
        acc_sc[...] = alpha * acc_sc[...] + pv
        m_sc[...] = m_new

        @pl.when(kv == pl.num_programs(2) - 1)
        def _():
            if precise_recip:
                inv_l = 1.0 / l_sc[...]
            else:
                inv_l = pl.reciprocal(l_sc[...], approx=True)
            o = (acc_sc[...] * inv_l).astype(o_ref.dtype)          # (BHT, TQ, D)
            # Lane-dense output block: heads packed adjacently along lanes.
            for t in range(bht):
                o_ref[0, :, t * d:(t + 1) * d] = o[t]

    return kernel


def sdpa_pallas(query, key, value):
    """Scaled dot-product attention matching the PyTorch Model.forward."""
    assert query.shape == key.shape == value.shape
    orig_dtype = query.dtype
    *lead, S, D = query.shape
    BH = 1
    for x in lead:
        BH *= int(x)

    q = query.reshape(BH, S, D)
    k = key.reshape(BH, S, D)
    v = value.reshape(BH, S, D)

    gen = _tpu_generation()
    scoped_vmem, tile_budget = _vmem_budget(gen)

    # Optional bf16 MXU path for f32 inputs (off by default for strict parity).
    bf16_compute = (_ALLOW_BF16_COMPUTE_FOR_F32
                    and jnp.dtype(orig_dtype) == jnp.dtype(jnp.float32)
                    and gen is not None and gen >= 5)
    if bf16_compute:
        q, k, v = (t.astype(jnp.bfloat16) for t in (q, k, v))

    itemsize = jnp.dtype(q.dtype).itemsize
    sublane = {4: 8, 2: 16, 1: 32}.get(itemsize, 8)

    # Generation-aware tile targets: v5e/v6e were KV-DMA bound at TQ=256;
    # v7x keeps 256 (compute-bound already, only 64 MiB VMEM per TC).
    tq_target = 512 if (gen is not None and gen in (5, 6)) else 256
    tk_target = 512

    TQ, S_pad_q = _choose_tile(S, tq_target, sublane)
    TK, S_pad_k = _choose_tile(S, tk_target, sublane)
    n_q_tiles = S_pad_q // TQ
    n_k_tiles = S_pad_k // TK
    needs_key_mask = S_pad_k != S

    BHT = _pick_bht(BH, n_q_tiles, S, D, TQ, TK, itemsize, tile_budget)
    G = BH // BHT

    if S_pad_q != S:
        q = jnp.pad(q, ((0, 0), (0, S_pad_q - S), (0, 0)))
    if S_pad_k != S:
        k = jnp.pad(k, ((0, 0), (0, S_pad_k - S), (0, 0)))
        v = jnp.pad(v, ((0, 0), (0, S_pad_k - S), (0, 0)))

    sm_scale = 1.0 / math.sqrt(float(D))
    compute_is_bf16 = jnp.dtype(q.dtype) == jnp.dtype(jnp.bfloat16)
    exp_in_bf16 = compute_is_bf16 and gen is not None and gen >= 6
    precise_recip = (jnp.dtype(orig_dtype) == jnp.dtype(jnp.float32)
                     and not compute_is_bf16)

    q_spec = pl.BlockSpec((BHT, TQ, D), lambda b, qi, ki: (b, qi, 0))
    kv_spec = pl.BlockSpec((BHT, TK, D), lambda b, qi, ki: (b, ki, 0))
    # Lane-dense output: last dim of the output block is BHT*D.
    o_spec = pl.BlockSpec((1, TQ, BHT * D), lambda b, qi, ki: (b, qi, 0))

    cost = pl.CostEstimate(
        flops=4 * BH * S_pad_q * S_pad_k * D,
        transcendentals=BH * S_pad_q * S_pad_k,
        bytes_accessed=itemsize * (2 * BH * S_pad_q * D
                                   + 2 * n_q_tiles * BH * S_pad_k * D),
    )

    compiler_kwargs = dict(
        dimension_semantics=("parallel", "parallel", "arbitrary"))
    if scoped_vmem is not None:
        compiler_kwargs["vmem_limit_bytes"] = int(scoped_vmem)

    out = pl.pallas_call(
        _make_flash_kernel(sm_scale, BHT, D, TK, S, needs_key_mask,
                           exp_in_bf16, precise_recip),
        out_shape=jax.ShapeDtypeStruct((G, S_pad_q, BHT * D), orig_dtype),
        grid_spec=pltpu.PrefetchScalarGridSpec(
            num_scalar_prefetch=0,
            grid=(G, n_q_tiles, n_k_tiles),
            in_specs=[q_spec, kv_spec, kv_spec],
            out_specs=o_spec,
            scratch_shapes=[
                pltpu.VMEM((BHT, TQ, 1), jnp.float32),   # running max
                pltpu.VMEM((BHT, TQ, 1), jnp.float32),   # running denom
                pltpu.VMEM((BHT, TQ, D), jnp.float32),   # f32 accumulator
                pltpu.VMEM((BHT, TQ, D), q.dtype),       # pre-scaled Q (hoisted)
            ],
        ),
        compiler_params=pltpu.CompilerParams(**compiler_kwargs),
        cost_estimate=cost,
    )(q, k, v)

    # Un-pack the lane-dense head layout and strip query padding (layout only).
    out = out[:, :S, :].reshape(G, S, BHT, D)
    out = jnp.transpose(out, (0, 2, 1, 3)).reshape(BH, S, D)
    return out.reshape(*lead, S, D)


if __name__ == "__main__":
    key_rng = jax.random.PRNGKey(0)
    kq, kk, kv = jax.random.split(key_rng, 3)

    B, H, S, D = 2, 4, 8, 32
    query = jax.random.normal(kq, (B, H, S, D), dtype=jnp.float32)
    key = jax.random.normal(kk, (B, H, S, D), dtype=jnp.float32)
    value = jax.random.normal(kv, (B, H, S, D), dtype=jnp.float32)

    out = sdpa_pallas(query, key, value)
    out = jax.block_until_ready(out)

    # reference check in plain JAX (matches the PyTorch module)
    inv_scale = math.sqrt(D)
    s = jnp.matmul(query, jnp.swapaxes(key, -2, -1)) / inv_scale
    ref = jnp.matmul(jax.nn.softmax(s, axis=-1), value)
    assert jnp.allclose(out, ref, atol=2e-3, rtol=2e-3), "mismatch vs reference"

    print("KERNEL_OK")
</pallas_src>

<mosaic_0001>
module attributes {stable_mosaic.version = 11 : i64} {
  func.func @kernel(%arg0: i32, %arg1: i32, %arg2: i32, %arg3: memref<4x8x32xf32, #tpu.memory_space<vmem>>, %arg4: memref<4x8x32xf32, #tpu.memory_space<vmem>>, %arg5: memref<4x8x32xf32, #tpu.memory_space<vmem>>, %arg6: memref<1x8x128xf32, #tpu.memory_space<vmem>>, %arg7: memref<4x8x1xf32, #tpu.memory_space<vmem>>, %arg8: memref<4x8x1xf32, #tpu.memory_space<vmem>>, %arg9: memref<4x8x32xf32, #tpu.memory_space<vmem>>, %arg10: memref<4x8x32xf32, #tpu.memory_space<vmem>>) attributes {dimension_semantics = [#tpu.dimension_semantics<parallel>, #tpu.dimension_semantics<parallel>, #tpu.dimension_semantics<arbitrary>], iteration_bounds = array<i64: 2, 1, 1>, scalar_prefetch = 0 : i64, scratch_operands = 4 : i64, tpu.core_type = #tpu.core_type<tc>, window_params = [{transform_indices = @transform_0, window_bounds = array<i64: 4, 8, 32>}, {transform_indices = @transform_1, window_bounds = array<i64: 4, 8, 32>}, {transform_indices = @transform_2, window_bounds = array<i64: 4, 8, 32>}, {transform_indices = @transform_3, window_bounds = array<i64: 1, 8, 128>}]} {
    %c0_i32 = arith.constant 0 : i32
    %0 = arith.cmpi eq, %arg2, %c0_i32 : i32
    %1 = arith.extui %0 : i1 to i32
    %c0_i32_0 = arith.constant 0 : i32
    %2 = arith.cmpi ne, %1, %c0_i32_0 : i32
    scf.if %2 {
      %cst_32 = arith.constant 0xFF800000 : f32
      %32 = vector.broadcast %cst_32 : f32 to vector<4x8x1xf32>
      %c0_33 = arith.constant 0 : index
      %c0_34 = arith.constant 0 : index
      %c0_35 = arith.constant 0 : index
      %33 = vector.load %arg7[%c0_33, %c0_34, %c0_35] : memref<4x8x1xf32, #tpu.memory_space<vmem>>, vector<4x8x1xf32>
      tpu.vector_store %arg7[%c0_33, %c0_34, %c0_35], %32 {strides = array<i32>} : memref<4x8x1xf32, #tpu.memory_space<vmem>>, vector<4x8x1xf32>,
      %cst_36 = arith.constant 0.000000e+00 : f32
      %34 = vector.broadcast %cst_36 : f32 to vector<4x8x1xf32>
      %c0_37 = arith.constant 0 : index
      %c0_38 = arith.constant 0 : index
      %c0_39 = arith.constant 0 : index
      %35 = vector.load %arg8[%c0_37, %c0_38, %c0_39] : memref<4x8x1xf32, #tpu.memory_space<vmem>>, vector<4x8x1xf32>
      tpu.vector_store %arg8[%c0_37, %c0_38, %c0_39], %34 {strides = array<i32>} : memref<4x8x1xf32, #tpu.memory_space<vmem>>, vector<4x8x1xf32>,
      %cst_40 = arith.constant 0.000000e+00 : f32
      %36 = vector.broadcast %cst_40 : f32 to vector<4x8x32xf32>
      %c0_41 = arith.constant 0 : index
      %c0_42 = arith.constant 0 : index
      %c0_43 = arith.constant 0 : index
      %37 = vector.load %arg9[%c0_41, %c0_42, %c0_43] : memref<4x8x32xf32, #tpu.memory_space<vmem>>, vector<4x8x32xf32>
      tpu.vector_store %arg9[%c0_41, %c0_42, %c0_43], %36 {strides = array<i32>} : memref<4x8x32xf32, #tpu.memory_space<vmem>>, vector<4x8x32xf32>,
      %c0_44 = arith.constant 0 : index
      %c0_45 = arith.constant 0 : index
      %c0_46 = arith.constant 0 : index
      %38 = vector.load %arg3[%c0_44, %c0_45, %c0_46] : memref<4x8x32xf32, #tpu.memory_space<vmem>>, vector<4x8x32xf32>
      %cst_47 = arith.constant 0.176776692 : f32
      %39 = vector.broadcast %cst_47 : f32 to vector<4x8x32xf32>
      %40 = arith.mulf %38, %39 : vector<4x8x32xf32>
      %c0_48 = arith.constant 0 : index
      %c0_49 = arith.constant 0 : index
      %c0_50 = arith.constant 0 : index
      %41 = vector.load %arg10[%c0_48, %c0_49, %c0_50] : memref<4x8x32xf32, #tpu.memory_space<vmem>>, vector<4x8x32xf32>
      tpu.vector_store %arg10[%c0_48, %c0_49, %c0_50], %40 {strides = array<i32>} : memref<4x8x32xf32, #tpu.memory_space<vmem>>, vector<4x8x32xf32>,
    } else {
    }
    %c0 = arith.constant 0 : index
    %c0_1 = arith.constant 0 : index
    %c0_2 = arith.constant 0 : index
    %3 = vector.load %arg10[%c0, %c0_1, %c0_2] : memref<4x8x32xf32, #tpu.memory_space<vmem>>, vector<4x8x32xf32>
    %c0_3 = arith.constant 0 : index
    %c0_4 = arith.constant 0 : index
    %c0_5 = arith.constant 0 : index
    %4 = vector.load %arg4[%c0_3, %c0_4, %c0_5] : memref<4x8x32xf32, #tpu.memory_space<vmem>>, vector<4x8x32xf32>
    %c0_6 = arith.constant 0 : index
    %c0_7 = arith.constant 0 : index
    %c0_8 = arith.constant 0 : index
    %5 = vector.load %arg5[%c0_6, %c0_7, %c0_8] : memref<4x8x32xf32, #tpu.memory_space<vmem>>, vector<4x8x32xf32>
    "tpu.trace_start"() <{level = 10 : i32, message = "bqd,bkd->bqk"}> : () -> ()
    %cst = arith.constant dense<0.000000e+00> : vector<4x8x8xf32>
    %6 = tpu.matmul %3, %4, %cst {dimension_numbers = #tpu.dot_dimension_numbers<[2], [2], [1], [1], [0, 0, 0, 1, 1, 1], [0], [0]>} : vector<4x8x32xf32>, vector<4x8x32xf32>, vector<4x8x8xf32> -> vector<4x8x8xf32>
    "tpu.trace_stop"() : () -> ()
    %c0_9 = arith.constant 0 : index
    %c0_10 = arith.constant 0 : index
    %c0_11 = arith.constant 0 : index
    %7 = vector.load %arg7[%c0_9, %c0_10, %c0_11] : memref<4x8x1xf32, #tpu.memory_space<vmem>>, vector<4x8x1xf32>
    %cst_12 = arith.constant dense<0xFF800000> : vector<4x8xf32>
    %8 = vector.multi_reduction <maximumf>, %6, %cst_12 [2] : vector<4x8x8xf32> to vector<4x8xf32>
    %9 = vector.shape_cast %8 : vector<4x8xf32> to vector<4x8x1xf32>
    %10 = arith.maximumf %7, %9 : vector<4x8x1xf32>
    %11 = arith.subf %7, %10 : vector<4x8x1xf32>
    %12 = math.exp %11 : vector<4x8x1xf32>
    %13 = vector.broadcast %10 : vector<4x8x1xf32> to vector<4x8x8xf32>
    %14 = arith.subf %6, %13 : vector<4x8x8xf32>
    %15 = math.exp %14 : vector<4x8x8xf32>
    %c0_13 = arith.constant 0 : index
    %c0_14 = arith.constant 0 : index
    %c0_15 = arith.constant 0 : index
    %16 = vector.load %arg8[%c0_13, %c0_14, %c0_15] : memref<4x8x1xf32, #tpu.memory_space<vmem>>, vector<4x8x1xf32>
    %17 = arith.mulf %12, %16 : vector<4x8x1xf32>
    %cst_16 = arith.constant dense<0.000000e+00> : vector<4x8xf32>
    %18 = vector.multi_reduction <add>, %15, %cst_16 [2] : vector<4x8x8xf32> to vector<4x8xf32>
    %19 = vector.shape_cast %18 : vector<4x8xf32> to vector<4x8x1xf32>
    %20 = arith.addf %17, %19 : vector<4x8x1xf32>
    %c0_17 = arith.constant 0 : index
    %c0_18 = arith.constant 0 : index
    %c0_19 = arith.constant 0 : index
    %21 = vector.load %arg8[%c0_17, %c0_18, %c0_19] : memref<4x8x1xf32, #tpu.memory_space<vmem>>, vector<4x8x1xf32>
    tpu.vector_store %arg8[%c0_17, %c0_18, %c0_19], %20 {strides = array<i32>} : memref<4x8x1xf32, #tpu.memory_space<vmem>>, vector<4x8x1xf32>,
    "tpu.trace_start"() <{level = 10 : i32, message = "bqk,bkd->bqd"}> : () -> ()
    %cst_20 = arith.constant dense<0.000000e+00> : vector<4x8x32xf32>
    %22 = tpu.matmul %15, %5, %cst_20 {dimension_numbers = #tpu.dot_dimension_numbers<[2], [1], [1], [2], [0, 0, 0, 1, 1, 2], [0], [0]>} : vector<4x8x8xf32>, vector<4x8x32xf32>, vector<4x8x32xf32> -> vector<4x8x32xf32>
    "tpu.trace_stop"() : () -> ()
    %c0_21 = arith.constant 0 : index
    %c0_22 = arith.constant 0 : index
    %c0_23 = arith.constant 0 : index
    %23 = vector.load %arg9[%c0_21, %c0_22, %c0_23] : memref<4x8x32xf32, #tpu.memory_space<vmem>>, vector<4x8x32xf32>
    %24 = vector.broadcast %12 : vector<4x8x1xf32> to vector<4x8x32xf32>
    %25 = arith.mulf %24, %23 : vector<4x8x32xf32>
    %26 = arith.addf %25, %22 : vector<4x8x32xf32>
    %c0_24 = arith.constant 0 : index
    %c0_25 = arith.constant 0 : index
    %c0_26 = arith.constant 0 : index
    %27 = vector.load %arg9[%c0_24, %c0_25, %c0_26] : memref<4x8x32xf32, #tpu.memory_space<vmem>>, vector<4x8x32xf32>
    tpu.vector_store %arg9[%c0_24, %c0_25, %c0_26], %26 {strides = array<i32>} : memref<4x8x32xf32, #tpu.memory_space<vmem>>, vector<4x8x32xf32>,
    %c0_27 = arith.constant 0 : index
    %c0_28 = arith.constant 0 : index
    %c0_29 = arith.constant 0 : index
    %28 = vector.load %arg7[%c0_27, %c0_28, %c0_29] : memref<4x8x1xf32, #tpu.memory_space<vmem>>, vector<4x8x1xf32>
    tpu.vector_store %arg7[%c0_27, %c0_28, %c0_29], %10 {strides = array<i32>} : memref<4x8x1xf32, #tpu.memory_space<vmem>>, vector<4x8x1xf32>,
    %c0_i32_30 = arith.constant 0 : i32
    %29 = arith.cmpi eq, %arg2, %c0_i32_30 : i32
    %30 = arith.extui %29 : i1 to i32
    %c0_i32_31 = arith.constant 0 : i32
    %31 = arith.cmpi ne, %30, %c0_i32_31 : i32
    scf.if %31 {
      %c0_32 = arith.constant 0 : index
      %c0_33 = arith.constant 0 : index
      %c0_34 = arith.constant 0 : index
      %32 = vector.load %arg8[%c0_32, %c0_33, %c0_34] : memref<4x8x1xf32, #tpu.memory_space<vmem>>, vector<4x8x1xf32>
      %cst_35 = arith.constant 1.000000e+00 : f32
      %33 = vector.broadcast %cst_35 : f32 to vector<4x8x1xf32>
      %34 = arith.divf %33, %32 : vector<4x8x1xf32>
      %c0_36 = arith.constant 0 : index
      %c0_37 = arith.constant 0 : index
      %c0_38 = arith.constant 0 : index
      %35 = vector.load %arg9[%c0_36, %c0_37, %c0_38] : memref<4x8x32xf32, #tpu.memory_space<vmem>>, vector<4x8x32xf32>
      %36 = vector.broadcast %34 : vector<4x8x1xf32> to vector<4x8x32xf32>
      %37 = arith.mulf %35, %36 : vector<4x8x32xf32>
      %38 = vector.extract_strided_slice %37 {offsets = [0, 0, 0], sizes = [1, 8, 32], strides = [1, 1, 1]} : vector<4x8x32xf32> to vector<1x8x32xf32>
      %39 = vector.shape_cast %38 : vector<1x8x32xf32> to vector<8x32xf32>
      %c0_39 = arith.constant 0 : index
      %c0_40 = arith.constant 0 : index
      %c0_41 = arith.constant 0 : index
      %40 = vector.load %arg6[%c0_39, %c0_40, %c0_41] : memref<1x8x128xf32, #tpu.memory_space<vmem>>, vector<1x8x32xf32>
      %41 = vector.shape_cast %40 : vector<1x8x32xf32> to vector<8x32xf32>
      %42 = vector.shape_cast %39 : vector<8x32xf32> to vector<1x8x32xf32>
      tpu.vector_store %arg6[%c0_39, %c0_40, %c0_41], %42 {strides = array<i32>} : memref<1x8x128xf32, #tpu.memory_space<vmem>>, vector<1x8x32xf32>,
      %43 = vector.extract_strided_slice %37 {offsets = [1, 0, 0], sizes = [1, 8, 32], strides = [1, 1, 1]} : vector<4x8x32xf32> to vector<1x8x32xf32>
      %44 = vector.shape_cast %43 : vector<1x8x32xf32> to vector<8x32xf32>
      %c0_42 = arith.constant 0 : index
      %c0_43 = arith.constant 0 : index
      %c32 = arith.constant 32 : index
      %45 = vector.load %arg6[%c0_42, %c0_43, %c32] : memref<1x8x128xf32, #tpu.memory_space<vmem>>, vector<1x8x32xf32>
      %46 = vector.shape_cast %45 : vector<1x8x32xf32> to vector<8x32xf32>
      %47 = vector.shape_cast %44 : vector<8x32xf32> to vector<1x8x32xf32>
      tpu.vector_store %arg6[%c0_42, %c0_43, %c32], %47 {strides = array<i32>} : memref<1x8x128xf32, #tpu.memory_space<vmem>>, vector<1x8x32xf32>,
      %48 = vector.extract_strided_slice %37 {offsets = [2, 0, 0], sizes = [1, 8, 32], strides = [1, 1, 1]} : vector<4x8x32xf32> to vector<1x8x32xf32>
      %49 = vector.shape_cast %48 : vector<1x8x32xf32> to vector<8x32xf32>
      %c0_44 = arith.constant 0 : index
      %c0_45 = arith.constant 0 : index
      %c64 = arith.constant 64 : index
      %50 = vector.load %arg6[%c0_44, %c0_45, %c64] : memref<1x8x128xf32, #tpu.memory_space<vmem>>, vector<1x8x32xf32>
      %51 = vector.shape_cast %50 : vector<1x8x32xf32> to vector<8x32xf32>
      %52 = vector.shape_cast %49 : vector<8x32xf32> to vector<1x8x32xf32>
      tpu.vector_store %arg6[%c0_44, %c0_45, %c64], %52 {strides = array<i32>} : memref<1x8x128xf32, #tpu.memory_space<vmem>>, vector<1x8x32xf32>,
      %53 = vector.extract_strided_slice %37 {offsets = [3, 0, 0], sizes = [1, 8, 32], strides = [1, 1, 1]} : vector<4x8x32xf32> to vector<1x8x32xf32>
      %54 = vector.shape_cast %53 : vector<1x8x32xf32> to vector<8x32xf32>
      %c0_46 = arith.constant 0 : index
      %c0_47 = arith.constant 0 : index
      %c96 = arith.constant 96 : index
      %55 = vector.load %arg6[%c0_46, %c0_47, %c96] : memref<1x8x128xf32, #tpu.memory_space<vmem>>, vector<1x8x32xf32>
      %56 = vector.shape_cast %55 : vector<1x8x32xf32> to vector<8x32xf32>
      %57 = vector.shape_cast %54 : vector<8x32xf32> to vector<1x8x32xf32>
      tpu.vector_store %arg6[%c0_46, %c0_47, %c96], %57 {strides = array<i32>} : memref<1x8x128xf32, #tpu.memory_space<vmem>>, vector<1x8x32xf32>,
    } else {
    }
    return
  }
  func.func @transform_0(%arg0: i32, %arg1: i32, %arg2: i32) -> (i32, i32, i32) {
    %c0_i32 = arith.constant 0 : i32
    %c0_i32_0 = arith.constant 0 : i32
    return %arg0, %arg1, %c0_i32 : i32, i32, i32
  }
  func.func @transform_1(%arg0: i32, %arg1: i32, %arg2: i32) -> (i32, i32, i32) {
    %c0_i32 = arith.constant 0 : i32
    %c0_i32_0 = arith.constant 0 : i32
    return %arg0, %arg2, %c0_i32 : i32, i32, i32
  }
  func.func @transform_2(%arg0: i32, %arg1: i32, %arg2: i32) -> (i32, i32, i32) {
    %c0_i32 = arith.constant 0 : i32
    %c0_i32_0 = arith.constant 0 : i32
    return %arg0, %arg2, %c0_i32 : i32, i32, i32
  }
  func.func @transform_3(%arg0: i32, %arg1: i32, %arg2: i32) -> (i32, i32, i32) {
    %c0_i32 = arith.constant 0 : i32
    %c0_i32_0 = arith.constant 0 : i32
    return %arg0, %arg1, %c0_i32 : i32, i32, i32
  }
}

</mosaic_0001>

<llo_original>
// kernel: tpu_custom_call.1
$region0: #{tpu_custom_call.1}
  #allocation0 [shape = 'u32[]', space=smem, size = 0x4, offset = 0x4, fixed_abs, tag = 'smem constant byte address 0x4 - core index']
  #allocation1 [shape = 'u32[144,128]{1,0:T(1,128)}', space=vmem, size = 0x12000, scoped, tag = 'internal scratch']
  #allocation2 [shape = 'f32[4,8,1]{2,1,0:T(8,128)}', space=vmem, size = 0x4000, scoped, tag = 'scratch operand']
  #allocation3 [shape = 'f32[4,8,1]{2,1,0:T(8,128)}', space=vmem, size = 0x4000, scoped, tag = 'scratch operand']
  #allocation4 [shape = 'f32[4,8,32]{2,1,0:T(8,128)}', space=vmem, size = 0x4000, scoped, tag = 'scratch operand']
  #allocation5 [shape = 'f32[4,8,32]{2,1,0:T(8,128)}', space=vmem, size = 0x4000, scoped, tag = 'scratch operand']
  %s0 = inlined_call_operand.hbm [shape: f32[8,8,32], index: 0, kind: input, shape index: {}]
  %s1 = inlined_call_operand.hbm [shape: f32[8,8,32], index: 1, kind: input, shape index: {}]
  %s2 = inlined_call_operand.hbm [shape: f32[8,8,32], index: 2, kind: input, shape index: {}]
  %s3 = inlined_call_operand.hbm [shape: f32[2,8,128], index: 3, kind: output, shape index: {}]
  %s4 = sld [smem:[#allocation0]]
  $region65: #{tpu_custom_call.1} parent=0
    _
  %s6 = ssub.s32 1, %s4
  %s7 = scalar_select 0, %s6, %s4
  $region1: #{tpu_custom_call.1} parent=0
    #allocation6 [shape = 'u8[32768]{0}', space=vmem, size = 0x8000, scoped, tag = 'input window, operand 0']
    #allocation7 [shape = 's32[2]{0}', space=sflag, size = 0x8, scoped, tag = 'scoped memory for tpu_custom_call.1']
    #allocation8 [shape = 's32[2]{0}', space=sflag, size = 0x8, scoped, tag = 'scoped memory for tpu_custom_call.1']
    #allocation9 [shape = 'u8[32768]{0}', space=vmem, size = 0x8000, scoped, tag = 'input window, operand 1']
    #allocation10 [shape = 's32[2]{0}', space=sflag, size = 0x8, scoped, tag = 'scoped memory for tpu_custom_call.1']
    #allocation11 [shape = 'u8[32768]{0}', space=vmem, size = 0x8000, scoped, tag = 'input window, operand 2']
    #allocation12 [shape = 'u8[8192]{0}', space=vmem, size = 0x2000, scoped, tag = 'output window, operand 0']
    %8 = vsyncpa [#allocation7], 0
    %s9 = scalar_lea.sflag [#allocation7], 1
    %10 = vsyncpa %s9, 0
    %11 = vsyncpa [#allocation10], 0
    %s12 = scalar_lea.sflag [#allocation10], 1
    %13 = vsyncpa %s12, 0
    %14 = vsyncpa [#allocation8], 0
    %s15 = scalar_lea.sflag [#allocation8], 1
    %16 = vsyncpa %s15, 0
    loop: start=0, step=1, limit=4
    $region2: #{tpu_custom_call.1} parent=1 // loop_pre_header
      _
    $region3: #{tpu_custom_call.1} parent=1 // loop_header
      %s18 = sphi 0, %s22
      %p19 = scmp.ge.s32.totalorder %s18, 4
      %s25 = sphi 0, %s44
      %s26 = sphi 0, %s40
      %s27 = sphi 0, %s36
      %s28 = sphi 0, %s25
      %s29 = sphi 0, %s26
      %s30 = sphi 0, %s27
      %s31 = sphi 0, %s28
      %s32 = sphi 0, %s29
      %s33 = sphi 0, %s30
      %s49 = sphi 0, %s51
      %s52 = sphi 0, %s49
      %s53 = sphi 0, %s52
      %s69 = sphi 0, %s53
      %s77 = sphi 0, %s79
      %s80 = sphi 0, %s77
      %s81 = sphi 0, %s80
      %s97 = sphi 0, %s81
      %s105 = sphi 0, %s107
      %s108 = sphi 0, %s105
      %s109 = sphi 0, %s108
      %s125 = sphi 0, %s109
      %s133 = sphi 0, %s135
      %s136 = sphi 0, %s133
      %s137 = sphi 0, %s136
      %s153 = sphi 0, %s137
    $region4: #{tpu_custom_call.1} parent=1 // loop_header_branch
      %21 = sbr.rel (%p19) target = $region8
    $region5: #{tpu_custom_call.1} parent=1 // loop_body
      %s23 = ssub.s32 %s18, 1
      %s24 = ssub.s32 %s18, 2
      %s34 = sadd.s32 1, %s27
      %p35 = scmp.ge.s32.totalorder %s34, 1
      %s36 = scalar_select %p35, 0, %s34
      %s37 = sadd.s32 1, %s26
      %s38 = scalar_select %p35, %s37, %s26
      %p39 = scmp.ge.s32.totalorder %s38, 1
      %s40 = scalar_select %p39, 0, %s38
      %s41 = sadd.s32 1, %s25
      %s42 = scalar_select %p39, %s41, %s25
      %p43 = scmp.ge.s32.totalorder %s42, 2
      %s44 = scalar_select %p43, 0, %s42
      %s45 = ssub.s32 %s25, %s44
      %s46 = ssub.s32 %s26, %s40
      %s47 = sor.u32 %s45, %s46
      %p48 = scmp.eq.s32.totalorder %s47, 0
      %s50 = sadd.s32 %s49, 1
      %s51 = scalar_select %p48, %s49, %s50
      %p54 = pneg %p48
      %p55 = scmp.eq.s32.totalorder %s18, 1
      %p56 = por %p54, %p55
      %p57 = scmp.ne.s32.totalorder %s49, %s52
      %p58 = scmp.eq.s32.totalorder %s18, 0
      %p59 = por %p57, %p58
      %p60 = scmp.ne.s32.totalorder %s49, %s52
      %p61 = scmp.eq.s32.totalorder %s23, 1
      %p62 = por %p60, %p61
      %p63 = scmp.ne.s32.totalorder %s52, %s53
      %p64 = scmp.eq.s32.totalorder %s23, 0
      %p65 = por %p63, %p64
      %p66 = scmp.ne.s32.totalorder %s52, %s53
      %p67 = scmp.eq.s32.totalorder %s24, 1
      %p68 = por %p66, %p67
      %p70 = scmp.ne.s32.totalorder %s53, %s69
      %p71 = scmp.eq.s32.totalorder %s24, 0
      %p72 = por %p70, %p71
      %s73 = ssub.s32 %s25, %s44
      %s74 = ssub.s32 %s27, %s36
      %s75 = sor.u32 %s73, %s74
      %p76 = scmp.eq.s32.totalorder %s75, 0
      %s78 = sadd.s32 %s77, 1
      %s79 = scalar_select %p76, %s77, %s78
      %p82 = pneg %p76
      %p83 = scmp.eq.s32.totalorder %s18, 1
      %p84 = por %p82, %p83
      %p85 = scmp.ne.s32.totalorder %s77, %s80
      %p86 = scmp.eq.s32.totalorder %s18, 0
      %p87 = por %p85, %p86
      %p88 = scmp.ne.s32.totalorder %s77, %s80
      %p89 = scmp.eq.s32.totalorder %s23, 1
      %p90 = por %p88, %p89
      %p91 = scmp.ne.s32.totalorder %s80, %s81
      %p92 = scmp.eq.s32.totalorder %s23, 0
      %p93 = por %p91, %p92
      %p94 = scmp.ne.s32.totalorder %s80, %s81
      %p95 = scmp.eq.s32.totalorder %s24, 1
      %p96 = por %p94, %p95
      %p98 = scmp.ne.s32.totalorder %s81, %s97
      %p99 = scmp.eq.s32.totalorder %s24, 0
      %p100 = por %p98, %p99
      %s101 = ssub.s32 %s25, %s44
      %s102 = ssub.s32 %s27, %s36
      %s103 = sor.u32 %s101, %s102
      %p104 = scmp.eq.s32.totalorder %s103, 0
      %s106 = sadd.s32 %s105, 1
      %s107 = scalar_select %p104, %s105, %s106
      %p110 = pneg %p104
      %p111 = scmp.eq.s32.totalorder %s18, 1
      %p112 = por %p110, %p111
      %p113 = scmp.ne.s32.totalorder %s105, %s108
      %p114 = scmp.eq.s32.totalorder %s18, 0
      %p115 = por %p113, %p114
      %p116 = scmp.ne.s32.totalorder %s105, %s108
      %p117 = scmp.eq.s32.totalorder %s23, 1
      %p118 = por %p116, %p117
      %p119 = scmp.ne.s32.totalorder %s108, %s109
      %p120 = scmp.eq.s32.totalorder %s23, 0
      %p121 = por %p119, %p120
      %p122 = scmp.ne.s32.totalorder %s108, %s109
      %p123 = scmp.eq.s32.totalorder %s24, 1
      %p124 = por %p122, %p123
      %p126 = scmp.ne.s32.totalorder %s109, %s125
      %p127 = scmp.eq.s32.totalorder %s24, 0
      %p128 = por %p126, %p127
      %s129 = ssub.s32 %s25, %s44
      %s130 = ssub.s32 %s26, %s40
      %s131 = sor.u32 %s129, %s130
      %p132 = scmp.eq.s32.totalorder %s131, 0
      %s134 = sadd.s32 %s133, 1
      %s135 = scalar_select %p132, %s133, %s134
      %p138 = pneg %p132
      %p139 = scmp.eq.s32.totalorder %s18, 1
      %p140 = por %p138, %p139
      %p141 = scmp.ne.s32.totalorder %s133, %s136
      %p142 = scmp.eq.s32.totalorder %s18, 0
      %p143 = por %p141, %p142
      %p144 = scmp.ne.s32.totalorder %s133, %s136
      %p145 = scmp.eq.s32.totalorder %s23, 1
      %p146 = por %p144, %p145
      %p147 = scmp.ne.s32.totalorder %s136, %s137
      %p148 = scmp.eq.s32.totalorder %s23, 0
      %p149 = por %p147, %p148
      %p150 = scmp.ne.s32.totalorder %s136, %s137
      %p151 = scmp.eq.s32.totalorder %s24, 1
      %p152 = por %p150, %p151
      %p154 = scmp.ne.s32.totalorder %s137, %s153
      %p155 = scmp.eq.s32.totalorder %s24, 0
      %p156 = por %p154, %p155
      %p157 = scmp.le.s32.totalorder 1, %s18
      %p158 = scmp.lt.s32.totalorder %s18, 3
      %p159 = pnand %p157, %p158
      %p160 = pneg %p159
      // Predicated region
      $region9: #{tpu_custom_call.1} parent=5 // pred_check
        _
      $region10: #{tpu_custom_call.1} parent=5 // pred_check_branch
        %162 = sbr.rel (%p159) target = $region12
      $region11: #{tpu_custom_call.1} parent=5 // pred_region
        %s163 = ssub.s32 %s18, 1
      $region12: #{tpu_custom_call.1} parent=5 // pred_fallthru
        _
      %p164 = scmp.lt.s32.totalorder %s18, 2
      // Predicated region
      $region13: #{tpu_custom_call.1} parent=5 // pred_check
        %p165 = pneg %p164
      $region14: #{tpu_custom_call.1} parent=5 // pred_check_branch
        %167 = sbr.rel (%p165) target = $region16
      $region15: #{tpu_custom_call.1} parent=5 // pred_region
        // Predicated region
        $region17: #{tpu_custom_call.1} parent=15 // pred_check
          %p168 = pneg %p59
        $region18: #{tpu_custom_call.1} parent=15 // pred_check_branch
          %170 = sbr.rel (%p168) target = $region20
        $region19: #{tpu_custom_call.1} parent=15 // pred_region
          %s171 = sand.u32 %s49, 1
          %s172 = scalar_lea.sflag [#allocation7], %s171
          %s173 = sand.u32 %s49, 1
          %s174 = smul.addr %s173, 32
          %s175 = scalar_lea.vmem [#allocation6], %s174
          %s176 = smul.u32 4, %s25
          %s178 = ssub.s32 512, 512
          %179 = vsyncadd %s172, %s178
          %s180 = sadd.s32 %s26, %s176
          %s181 = smul.addr %s180, 128
          %s182 = scalar_lea.hbm %s0, %s181
          %s183 = sshll.u32 %s175, 4
          %s184 = int_to_ptr.vmem [resolvable:$true] %s183
          %189 = dma.hbm_to_vmem [thread:$0]  %s182, 512, %s184, %s172, 128, 128, 8
        $region20: #{tpu_custom_call.1} parent=15 // pred_fallthru
          _
        // Predicated region
        $region21: #{tpu_custom_call.1} parent=15 // pred_check
          %p190 = pneg %p87
        $region22: #{tpu_custom_call.1} parent=15 // pred_check_branch
          %192 = sbr.rel (%p190) target = $region24
        $region23: #{tpu_custom_call.1} parent=15 // pred_region
          %s193 = sand.u32 %s18, 1
          %s194 = scalar_lea.sflag [#allocation10], %s193
          %s195 = sand.u32 %s77, 1
          %s196 = smul.addr %s195, 32
          %s197 = scalar_lea.vmem [#allocation9], %s196
          %s198 = smul.u32 4, %s25
          %s200 = ssub.s32 512, 512
          %201 = vsyncadd %s194, %s200
          %s202 = sadd.s32 %s27, %s198
          %s203 = smul.addr %s202, 128
          %s204 = scalar_lea.hbm %s1, %s203
          %s205 = sshll.u32 %s197, 4
          %s206 = int_to_ptr.vmem [resolvable:$true] %s205
          %211 = dma.hbm_to_vmem [thread:$0]  %s204, 512, %s206, %s194, 128, 128, 8
        $region24: #{tpu_custom_call.1} parent=15 // pred_fallthru
          _
        // Predicated region
        $region25: #{tpu_custom_call.1} parent=15 // pred_check
          %p212 = pneg %p115
        $region26: #{tpu_custom_call.1} parent=15 // pred_check_branch
          %214 = sbr.rel (%p212) target = $region28
        $region27: #{tpu_custom_call.1} parent=15 // pred_region
          %s215 = sand.u32 %s18, 1
          %s216 = scalar_lea.sflag [#allocation10], %s215
          %s217 = sand.u32 %s105, 1
          %s218 = smul.addr %s217, 32
          %s219 = scalar_lea.vmem [#allocation11], %s218
          %s220 = smul.u32 4, %s25
          %s222 = ssub.s32 512, 512
          %223 = vsyncadd %s216, %s222
          %s224 = sadd.s32 %s27, %s220
          %s225 = smul.addr %s224, 128
          %s226 = scalar_lea.hbm %s2, %s225
          %s227 = sshll.u32 %s219, 4
          %s228 = int_to_ptr.vmem [resolvable:$true] %s227
          %233 = dma.hbm_to_vmem [thread:$0]  %s226, 512, %s228, %s216, 128, 128, 8
        $region28: #{tpu_custom_call.1} parent=15 // pred_fallthru
          _
      $region16: #{tpu_custom_call.1} parent=5 // pred_fallthru
        _
      %p234 = scmp.le.s32.totalorder 1, %s18
      %p235 = scmp.lt.s32.totalorder %s18, 3
      %p236 = pnand %p234, %p235
      %p237 = pneg %p236
      // Predicated region
      $region29: #{tpu_custom_call.1} parent=5 // pred_check
        _
      $region30: #{tpu_custom_call.1} parent=5 // pred_check_branch
        %239 = sbr.rel (%p236) target = $region32
      $region31: #{tpu_custom_call.1} parent=5 // pred_region
        %s240 = ssub.s32 %s18, 1
        %s241 = sand.u32 %s52, 1
        %s242 = scalar_lea.sflag [#allocation7], %s241
        %s243 = sand.u32 %s52, 1
        %s244 = smul.addr %s243, 32
        %s245 = scalar_lea.vmem [#allocation6], %s244
        // Predicated region
        $region33: #{tpu_custom_call.1} parent=31 // pred_check
          %p246 = pneg %p65
        $region34: #{tpu_custom_call.1} parent=31 // pred_check_branch
          %248 = sbr.rel (%p246) target = $region36
        $region35: #{tpu_custom_call.1} parent=31 // pred_region
          %249 = dma.done %s242, 512
        $region36: #{tpu_custom_call.1} parent=31 // pred_fallthru
          _
        %s250 = sand.u32 %s23, 1
        %s251 = scalar_lea.sflag [#allocation10], %s250
        %s252 = sand.u32 %s80, 1
        %s253 = smul.addr %s252, 32
        %s254 = scalar_lea.vmem [#allocation9], %s253
        // Predicated region
        $region37: #{tpu_custom_call.1} parent=31 // pred_check
          %p255 = pneg %p93
        $region38: #{tpu_custom_call.1} parent=31 // pred_check_branch
          %257 = sbr.rel (%p255) target = $region40
        $region39: #{tpu_custom_call.1} parent=31 // pred_region
          %258 = dma.done %s251, 512
        $region40: #{tpu_custom_call.1} parent=31 // pred_fallthru
          _
        %s259 = sand.u32 %s23, 1
        %s260 = scalar_lea.sflag [#allocation10], %s259
        %s261 = sand.u32 %s108, 1
        %s262 = smul.addr %s261, 32
        %s263 = scalar_lea.vmem [#allocation11], %s262
        // Predicated region
        $region41: #{tpu_custom_call.1} parent=31 // pred_check
          %p264 = pneg %p121
        $region42: #{tpu_custom_call.1} parent=31 // pred_check_branch
          %266 = sbr.rel (%p264) target = $region44
        $region43: #{tpu_custom_call.1} parent=31 // pred_region
          %267 = dma.done %s260, 512
        $region44: #{tpu_custom_call.1} parent=31 // pred_fallthru
          _
        %s268 = sand.u32 %s52, 1
        %s269 = scalar_lea.sflag [#allocation7], %s268
        %s270 = sand.u32 %s52, 1
        %s271 = smul.addr %s270, 32
        %s272 = scalar_lea.vmem [#allocation6], %s271
        %p273 = pneg %p65
        %p274 = pneg %p62
        %s275 = sand.u32 %s23, 1
        %s276 = scalar_lea.sflag [#allocation10], %s275
        %s277 = sand.u32 %s80, 1
        %s278 = smul.addr %s277, 32
        %s279 = scalar_lea.vmem [#allocation9], %s278
        %p280 = pneg %p93
        %p281 = pneg %p90
        %s282 = sand.u32 %s23, 1
        %s283 = scalar_lea.sflag [#allocation10], %s282
        %s284 = sand.u32 %s108, 1
        %s285 = smul.addr %s284, 32
        %s286 = scalar_lea.vmem [#allocation11], %s285
        %p287 = pneg %p121
        %p288 = pneg %p118
        %p289 = pneg %p149
        %p290 = pneg %p146
        %s291 = sand.u32 %s136, 1
        %s292 = scalar_lea.sflag [#allocation8], %s291
        %s293 = sand.u32 %s136, 1
        %s294 = smul.addr %s293, 8
        %s295 = scalar_lea.vmem [#allocation12], %s294
        %s296 = smul.u32 4, %s28
        %s297 = smul.u32 4, %s28
        %s298 = smul.u32 4, %s28
        %p299 = scmp.eq.s32.totalorder %s30, 0
        // Predicated region
        $region45: #{tpu_custom_call.1} parent=31 // pred_check
          %p300 = pneg %p299
        $region46: #{tpu_custom_call.1} parent=31 // pred_check_branch
          %302 = sbr.rel (%p300) target = $region48
        $region47: #{tpu_custom_call.1} parent=31 // pred_region
          %vm303 = vcmask 7168
          %304 = vst.msk [vmem:[#allocation2] sm:$0xff] %vm303, -inf
          %305 = vst.msk [vmem:[#allocation2 + $0x8] sm:$0xff] %vm303, -inf
          %306 = vst.msk [vmem:[#allocation2 + $0x10] sm:$0xff] %vm303, -inf
          %307 = vst.msk [vmem:[#allocation2 + $0x18] sm:$0xff] %vm303, -inf
          %308 = vst.msk [vmem:[#allocation3] sm:$0xff] %vm303, 0.0
          %309 = vst.msk [vmem:[#allocation3 + $0x8] sm:$0xff] %vm303, 0.0
          %310 = vst.msk [vmem:[#allocation3 + $0x10] sm:$0xff] %vm303, 0.0
          %311 = vst.msk [vmem:[#allocation3 + $0x18] sm:$0xff] %vm303, 0.0
          %vm312 = vcmask 261120
          %313 = vst.msk [vmem:[#allocation4] sm:$0xff] %vm312, 0.0
          %314 = vst.msk [vmem:[#allocation4 + $0x8] sm:$0xff] %vm312, 0.0
          %315 = vst.msk [vmem:[#allocation4 + $0x10] sm:$0xff] %vm312, 0.0
          %316 = vst.msk [vmem:[#allocation4 + $0x18] sm:$0xff] %vm312, 0.0
          %v317 = vld [vmem:[%s245] sm:$0xff]
          %v318 = vld [vmem:[%s245 + $0x8] sm:$0xff]
          %v319 = vld [vmem:[%s245 + $0x10] sm:$0xff]
          %v320 = vld [vmem:[%s245 + $0x18] sm:$0xff]
          %v321 = vmul.f32 %v317, 0.17677669
          %v322 = vmul.f32 %v318, 0.17677669
          %v323 = vmul.f32 %v319, 0.17677669
          %v324 = vmul.f32 %v320, 0.17677669
          %325 = vst.msk [vmem:[#allocation5] sm:$0xff] %vm312, %v321
          %326 = vst.msk [vmem:[#allocation5 + $0x8] sm:$0xff] %vm312, %v322
          %327 = vst.msk [vmem:[#allocation5 + $0x10] sm:$0xff] %vm312, %v323
          %328 = vst.msk [vmem:[#allocation5 + $0x18] sm:$0xff] %vm312, %v324
        $region48: #{tpu_custom_call.1} parent=31 // pred_fallthru
          _
        %v329 = vld [vmem:[#allocation5] sm:$0xff]
        %v330 = vld [vmem:[#allocation5 + $0x8] sm:$0xff]
        %v331 = vld [vmem:[#allocation5 + $0x10] sm:$0xff]
        %v332 = vld [vmem:[#allocation5 + $0x18] sm:$0xff]
        %v333 = vld [vmem:[%s254] sm:$0xff]
        %v334 = vld [vmem:[%s254 + $0x8] sm:$0xff]
        %v335 = vld [vmem:[%s254 + $0x10] sm:$0xff]
        %v336 = vld [vmem:[%s254 + $0x18] sm:$0xff]
        %v337 = vld [vmem:[%s263] sm:$0xff]
        %v338 = vld [vmem:[%s263 + $0x8] sm:$0xff]
        %v339 = vld [vmem:[%s263 + $0x10] sm:$0xff]
        %v340 = vld [vmem:[%s263 + $0x18] sm:$0xff]
        %vm341 = vcmask 261120
        %v343 = vsel %vm341, %v329, 0
        %v346 = vsel %vm341, %v333, 0
        %348 = vmatprep.subr.mxu0 0.0
        %349 = vmatpush1.xpose.msra.mxu0 0.0
        %350 = vmatprep.subr.mxu0 0.0
        %351 = vmatpush1.xpose.msra.mxu0 0.0
        %352 = vmatprep.subr.mxu0 0.0
        %353 = vmatpush1.xpose.msra.mxu0 0.0
        %354 = vmatprep.subr.mxu0 0.0
        %355 = vmatpush1.xpose.msra.mxu0 0.0
        %356 = vmatprep.subr.mxu0 0.0
        %357 = vmatpush1.xpose.msra.mxu0 0.0
        %358 = vmatprep.subr.mxu0 0.0
        %359 = vmatpush1.xpose.msra.mxu0 0.0
        %360 = vmatprep.subr.mxu0 0.0
        %361 = vmatpush1.xpose.msra.mxu0 0.0
        %362 = vmatprep.subr.mxu0 0.0
        %363 = vmatpush1.xpose.msra.mxu0 0.0
        %364 = vmatprep.subr.mxu0 0.0
        %365 = vmatpush1.xpose.msra.mxu0 0.0
        %366 = vmatprep.subr.mxu0 0.0
        %367 = vmatpush1.xpose.msra.mxu0 0.0
        %368 = vmatprep.subr.mxu0 0.0
        %369 = vmatpush1.xpose.msra.mxu0 0.0
        %370 = vmatprep.subr.mxu0 0.0
        %371 = vmatpush1.xpose.msra.mxu0 0.0
        %372 = vmatprep.subr.mxu0 0.0
        %373 = vmatpush1.xpose.msra.mxu0 0.0
        %374 = vmatprep.subr.mxu0 0.0
        %375 = vmatpush1.xpose.msra.mxu0 0.0
        %376 = vmatprep.subr.mxu0 0.0
        %377 = vmatpush1.xpose.msra.mxu0 0.0
        %378 = vmatprep.subr.mxu0 0.0
        %379 = vmatpush1.xpose.msra.mxu0 %v346
        %380 = vmatprep.subr.mxu0 0.0
        %381 = vmatpush2.xpose.msra.mxu0 0.0
        %382 = vmatprep.subr.mxu0 0.0
        %383 = vmatpush2.xpose.msra.mxu0 0.0
        %384 = vmatprep.subr.mxu0 0.0
        %385 = vmatpush2.xpose.msra.mxu0 0.0
        %386 = vmatprep.subr.mxu0 0.0
        %387 = vmatpush2.xpose.msra.mxu0 0.0
        %388 = vmatprep.subr.mxu0 0.0
        %389 = vmatpush2.xpose.msra.mxu0 0.0
        %390 = vmatprep.subr.mxu0 0.0
        %391 = vmatpush2.xpose.msra.mxu0 0.0
        %392 = vmatprep.subr.mxu0 0.0
        %393 = vmatpush2.xpose.msra.mxu0 0.0
        %394 = vmatprep.subr.mxu0 0.0
        %395 = vmatpush2.xpose.msra.mxu0 0.0
        %396 = vmatprep.subr.mxu0 0.0
        %397 = vmatpush2.xpose.msra.mxu0 0.0
        %398 = vmatprep.subr.mxu0 0.0
        %399 = vmatpush2.xpose.msra.mxu0 0.0
        %400 = vmatprep.subr.mxu0 0.0
        %401 = vmatpush2.xpose.msra.mxu0 0.0
        %402 = vmatprep.subr.mxu0 0.0
        %403 = vmatpush2.xpose.msra.mxu0 0.0
        %404 = vmatprep.subr.mxu0 0.0
        %405 = vmatpush2.xpose.msra.mxu0 0.0
        %406 = vmatprep.subr.mxu0 0.0
        %407 = vmatpush2.xpose.msra.mxu0 0.0
        %408 = vmatprep.subr.mxu0 0.0
        %409 = vmatpush2.xpose.msra.mxu0 0.0
        %410 = vmatprep.subr.mxu0 0.0
        %411 = vmatpush2.xpose.msra.mxu0 0.0
        %412 = vmatprep.mubr.f32.mxu0 0.0
        %413 = vmatmul.mubr.f32.gmra.mxu0 %v343
        %v414 = vpop.f32.mrf.mxu0
        %v415 = vadd.f32 0.0, %v414
        %v416 = vpop.f32.mrf.mxu0
        %417 = vdwg.mxu0
        %v419 = vsel %vm341, %v330, 0
        %v422 = vsel %vm341, %v334, 0
        %424 = vmatprep.subr.mxu0 0.0
        %425 = vmatpush1.xpose.msra.mxu0 0.0
        %426 = vmatprep.subr.mxu0 0.0
        %427 = vmatpush1.xpose.msra.mxu0 0.0
        %428 = vmatprep.subr.mxu0 0.0
        %429 = vmatpush1.xpose.msra.mxu0 0.0
        %430 = vmatprep.subr.mxu0 0.0
        %431 = vmatpush1.xpose.msra.mxu0 0.0
        %432 = vmatprep.subr.mxu0 0.0
        %433 = vmatpush1.xpose.msra.mxu0 0.0
        %434 = vmatprep.subr.mxu0 0.0
        %435 = vmatpush1.xpose.msra.mxu0 0.0
        %436 = vmatprep.subr.mxu0 0.0
        %437 = vmatpush1.xpose.msra.mxu0 0.0
        %438 = vmatprep.subr.mxu0 0.0
        %439 = vmatpush1.xpose.msra.mxu0 0.0
        %440 = vmatprep.subr.mxu0 0.0
        %441 = vmatpush1.xpose.msra.mxu0 0.0
        %442 = vmatprep.subr.mxu0 0.0
        %443 = vmatpush1.xpose.msra.mxu0 0.0
        %444 = vmatprep.subr.mxu0 0.0
        %445 = vmatpush1.xpose.msra.mxu0 0.0
        %446 = vmatprep.subr.mxu0 0.0
        %447 = vmatpush1.xpose.msra.mxu0 0.0
        %448 = vmatprep.subr.mxu0 0.0
        %449 = vmatpush1.xpose.msra.mxu0 0.0
        %450 = vmatprep.subr.mxu0 0.0
        %451 = vmatpush1.xpose.msra.mxu0 0.0
        %452 = vmatprep.subr.mxu0 0.0
        %453 = vmatpush1.xpose.msra.mxu0 0.0
        %454 = vmatprep.subr.mxu0 0.0
        %455 = vmatpush1.xpose.msra.mxu0 %v422
        %456 = vmatprep.subr.mxu0 0.0
        %457 = vmatpush2.xpose.msra.mxu0 0.0
        %458 = vmatprep.subr.mxu0 0.0
        %459 = vmatpush2.xpose.msra.mxu0 0.0
        %460 = vmatprep.subr.mxu0 0.0
        %461 = vmatpush2.xpose.msra.mxu0 0.0
        %462 = vmatprep.subr.mxu0 0.0
        %463 = vmatpush2.xpose.msra.mxu0 0.0
        %464 = vmatprep.subr.mxu0 0.0
        %465 = vmatpush2.xpose.msra.mxu0 0.0
        %466 = vmatprep.subr.mxu0 0.0
        %467 = vmatpush2.xpose.msra.mxu0 0.0
        %468 = vmatprep.subr.mxu0 0.0
        %469 = vmatpush2.xpose.msra.mxu0 0.0
        %470 = vmatprep.subr.mxu0 0.0
        %471 = vmatpush2.xpose.msra.mxu0 0.0
        %472 = vmatprep.subr.mxu0 0.0
        %473 = vmatpush2.xpose.msra.mxu0 0.0
        %474 = vmatprep.subr.mxu0 0.0
        %475 = vmatpush2.xpose.msra.mxu0 0.0
        %476 = vmatprep.subr.mxu0 0.0
        %477 = vmatpush2.xpose.msra.mxu0 0.0
        %478 = vmatprep.subr.mxu0 0.0
        %479 = vmatpush2.xpose.msra.mxu0 0.0
        %480 = vmatprep.subr.mxu0 0.0
        %481 = vmatpush2.xpose.msra.mxu0 0.0
        %482 = vmatprep.subr.mxu0 0.0
        %483 = vmatpush2.xpose.msra.mxu0 0.0
        %484 = vmatprep.subr.mxu0 0.0
        %485 = vmatpush2.xpose.msra.mxu0 0.0
        %486 = vmatprep.subr.mxu0 0.0
        %487 = vmatpush2.xpose.msra.mxu0 0.0
        %488 = vmatprep.mubr.f32.mxu0 0.0
        %489 = vmatmul.mubr.f32.gmra.mxu0 %v419
        %v490 = vpop.f32.mrf.mxu0
        %v491 = vadd.f32 0.0, %v490
        %v492 = vpop.f32.mrf.mxu0
        %493 = vdwg.mxu0
        %v495 = vsel %vm341, %v331, 0
        %v498 = vsel %vm341, %v335, 0
        %500 = vmatprep.subr.mxu0 0.0
        %501 = vmatpush1.xpose.msra.mxu0 0.0
        %502 = vmatprep.subr.mxu0 0.0
        %503 = vmatpush1.xpose.msra.mxu0 0.0
        %504 = vmatprep.subr.mxu0 0.0
        %505 = vmatpush1.xpose.msra.mxu0 0.0
        %506 = vmatprep.subr.mxu0 0.0
        %507 = vmatpush1.xpose.msra.mxu0 0.0
        %508 = vmatprep.subr.mxu0 0.0
        %509 = vmatpush1.xpose.msra.mxu0 0.0
        %510 = vmatprep.subr.mxu0 0.0
        %511 = vmatpush1.xpose.msra.mxu0 0.0
        %512 = vmatprep.subr.mxu0 0.0
        %513 = vmatpush1.xpose.msra.mxu0 0.0
        %514 = vmatprep.subr.mxu0 0.0
        %515 = vmatpush1.xpose.msra.mxu0 0.0
        %516 = vmatprep.subr.mxu0 0.0
        %517 = vmatpush1.xpose.msra.mxu0 0.0
        %518 = vmatprep.subr.mxu0 0.0
        %519 = vmatpush1.xpose.msra.mxu0 0.0
        %520 = vmatprep.subr.mxu0 0.0
        %521 = vmatpush1.xpose.msra.mxu0 0.0
        %522 = vmatprep.subr.mxu0 0.0
        %523 = vmatpush1.xpose.msra.mxu0 0.0
        %524 = vmatprep.subr.mxu0 0.0
        %525 = vmatpush1.xpose.msra.mxu0 0.0
        %526 = vmatprep.subr.mxu0 0.0
        %527 = vmatpush1.xpose.msra.mxu0 0.0
        %528 = vmatprep.subr.mxu0 0.0
        %529 = vmatpush1.xpose.msra.mxu0 0.0
        %530 = vmatprep.subr.mxu0 0.0
        %531 = vmatpush1.xpose.msra.mxu0 %v498
        %532 = vmatprep.subr.mxu0 0.0
        %533 = vmatpush2.xpose.msra.mxu0 0.0
        %534 = vmatprep.subr.mxu0 0.0
        %535 = vmatpush2.xpose.msra.mxu0 0.0
        %536 = vmatprep.subr.mxu0 0.0
        %537 = vmatpush2.xpose.msra.mxu0 0.0
        %538 = vmatprep.subr.mxu0 0.0
        %539 = vmatpush2.xpose.msra.mxu0 0.0
        %540 = vmatprep.subr.mxu0 0.0
        %541 = vmatpush2.xpose.msra.mxu0 0.0
        %542 = vmatprep.subr.mxu0 0.0
        %543 = vmatpush2.xpose.msra.mxu0 0.0
        %544 = vmatprep.subr.mxu0 0.0
        %545 = vmatpush2.xpose.msra.mxu0 0.0
        %546 = vmatprep.subr.mxu0 0.0
        %547 = vmatpush2.xpose.msra.mxu0 0.0
        %548 = vmatprep.subr.mxu0 0.0
        %549 = vmatpush2.xpose.msra.mxu0 0.0
        %550 = vmatprep.subr.mxu0 0.0
        %551 = vmatpush2.xpose.msra.mxu0 0.0
        %552 = vmatprep.subr.mxu0 0.0
        %553 = vmatpush2.xpose.msra.mxu0 0.0
        %554 = vmatprep.subr.mxu0 0.0
        %555 = vmatpush2.xpose.msra.mxu0 0.0
        %556 = vmatprep.subr.mxu0 0.0
        %557 = vmatpush2.xpose.msra.mxu0 0.0
        %558 = vmatprep.subr.mxu0 0.0
        %559 = vmatpush2.xpose.msra.mxu0 0.0
        %560 = vmatprep.subr.mxu0 0.0
        %561 = vmatpush2.xpose.msra.mxu0 0.0
        %562 = vmatprep.subr.mxu0 0.0
        %563 = vmatpush2.xpose.msra.mxu0 0.0
        %564 = vmatprep.mubr.f32.mxu0 0.0
        %565 = vmatmul.mubr.f32.gmra.mxu0 %v495
        %v566 = vpop.f32.mrf.mxu0
        %v567 = vadd.f32 0.0, %v566
        %v568 = vpop.f32.mrf.mxu0
        %569 = vdwg.mxu0
        %v571 = vsel %vm341, %v332, 0
        %v574 = vsel %vm341, %v336, 0
        %576 = vmatprep.subr.mxu0 0.0
        %577 = vmatpush1.xpose.msra.mxu0 0.0
        %578 = vmatprep.subr.mxu0 0.0
        %579 = vmatpush1.xpose.msra.mxu0 0.0
        %580 = vmatprep.subr.mxu0 0.0
        %581 = vmatpush1.xpose.msra.mxu0 0.0
        %582 = vmatprep.subr.mxu0 0.0
        %583 = vmatpush1.xpose.msra.mxu0 0.0
        %584 = vmatprep.subr.mxu0 0.0
        %585 = vmatpush1.xpose.msra.mxu0 0.0
        %586 = vmatprep.subr.mxu0 0.0
        %587 = vmatpush1.xpose.msra.mxu0 0.0
        %588 = vmatprep.subr.mxu0 0.0
        %589 = vmatpush1.xpose.msra.mxu0 0.0
        %590 = vmatprep.subr.mxu0 0.0
        %591 = vmatpush1.xpose.msra.mxu0 0.0
        %592 = vmatprep.subr.mxu0 0.0
        %593 = vmatpush1.xpose.msra.mxu0 0.0
        %594 = vmatprep.subr.mxu0 0.0
        %595 = vmatpush1.xpose.msra.mxu0 0.0
        %596 = vmatprep.subr.mxu0 0.0
        %597 = vmatpush1.xpose.msra.mxu0 0.0
        %598 = vmatprep.subr.mxu0 0.0
        %599 = vmatpush1.xpose.msra.mxu0 0.0
        %600 = vmatprep.subr.mxu0 0.0
        %601 = vmatpush1.xpose.msra.mxu0 0.0
        %602 = vmatprep.subr.mxu0 0.0
        %603 = vmatpush1.xpose.msra.mxu0 0.0
        %604 = vmatprep.subr.mxu0 0.0
        %605 = vmatpush1.xpose.msra.mxu0 0.0
        %606 = vmatprep.subr.mxu0 0.0
        %607 = vmatpush1.xpose.msra.mxu0 %v574
        %608 = vmatprep.subr.mxu0 0.0
        %609 = vmatpush2.xpose.msra.mxu0 0.0
        %610 = vmatprep.subr.mxu0 0.0
        %611 = vmatpush2.xpose.msra.mxu0 0.0
        %612 = vmatprep.subr.mxu0 0.0
        %613 = vmatpush2.xpose.msra.mxu0 0.0
        %614 = vmatprep.subr.mxu0 0.0
        %615 = vmatpush2.xpose.msra.mxu0 0.0
        %616 = vmatprep.subr.mxu0 0.0
        %617 = vmatpush2.xpose.msra.mxu0 0.0
        %618 = vmatprep.subr.mxu0 0.0
        %619 = vmatpush2.xpose.msra.mxu0 0.0
        %620 = vmatprep.subr.mxu0 0.0
        %621 = vmatpush2.xpose.msra.mxu0 0.0
        %622 = vmatprep.subr.mxu0 0.0
        %623 = vmatpush2.xpose.msra.mxu0 0.0
        %624 = vmatprep.subr.mxu0 0.0
        %625 = vmatpush2.xpose.msra.mxu0 0.0
        %626 = vmatprep.subr.mxu0 0.0
        %627 = vmatpush2.xpose.msra.mxu0 0.0
        %628 = vmatprep.subr.mxu0 0.0
        %629 = vmatpush2.xpose.msra.mxu0 0.0
        %630 = vmatprep.subr.mxu0 0.0
        %631 = vmatpush2.xpose.msra.mxu0 0.0
        %632 = vmatprep.subr.mxu0 0.0
        %633 = vmatpush2.xpose.msra.mxu0 0.0
        %634 = vmatprep.subr.mxu0 0.0
        %635 = vmatpush2.xpose.msra.mxu0 0.0
        %636 = vmatprep.subr.mxu0 0.0
        %637 = vmatpush2.xpose.msra.mxu0 0.0
        %638 = vmatprep.subr.mxu0 0.0
        %639 = vmatpush2.xpose.msra.mxu0 0.0
        %640 = vmatprep.mubr.f32.mxu0 0.0
        %641 = vmatmul.mubr.f32.gmra.mxu0 %v571
        %v642 = vpop.f32.mrf.mxu0
        %v643 = vadd.f32 0.0, %v642
        %v644 = vpop.f32.mrf.mxu0
        %645 = vdwg.mxu0
        %v646 = vld [vmem:[#allocation2] sm:$0xff]
        %v647 = vld [vmem:[#allocation2 + $0x8] sm:$0xff]
        %v648 = vld [vmem:[#allocation2 + $0x10] sm:$0xff]
        %v649 = vld [vmem:[#allocation2 + $0x18] sm:$0xff]
        %vm650 = vcmask 64512
        %v651 = vsel %vm650, %v415, -inf
        %652 = vmax.xlane.f32.xlu0 %v651
        %v653 = vpop.xlane.xlu0 %652
        %v654 = vsel %vm650, %v491, -inf
        %655 = vmax.xlane.f32.xlu0 %v654
        %v656 = vpop.xlane.xlu0 %655
        %v657 = vsel %vm650, %v567, -inf
        %658 = vmax.xlane.f32.xlu0 %v657
        %v659 = vpop.xlane.xlu0 %658
        %v660 = vsel %vm650, %v643, -inf
        %661 = vmax.xlane.f32.xlu0 %v660
        %v662 = vpop.xlane.xlu0 %661
        %v663 = vmax.f32 %v646, %v653
        %v664 = vmax.f32 %v647, %v656
        %v665 = vmax.f32 %v648, %v659
        %v666 = vmax.f32 %v649, %v662
        %v667 = vsub.f32 %v646, %v663
        %v668 = vsub.f32 %v647, %v664
        %v669 = vsub.f32 %v648, %v665
        %v670 = vsub.f32 %v649, %v666
        %v671 = vmul.f32 %v667, 1.442695
        %v672 = vpow.pop %v671
        %v673 = vmul.f32 %v668, 1.442695
        %v674 = vpow.pop %v673
        %v675 = vmul.f32 %v669, 1.442695
        %v676 = vpow.pop %v675
        %v677 = vmul.f32 %v670, 1.442695
        %v678 = vpow.pop %v677
        %680 = vset.pattern.permute.xlu0 0
        %681 = vperm.xlu0 %680, %v663
        %v682 = vpop.permute.xlu0 %681
        %685 = vset.pattern.permute.xlu0 0
        %686 = vperm.xlu0 %685, %v664
        %v687 = vpop.permute.xlu0 %686
        %690 = vset.pattern.permute.xlu0 0
        %691 = vperm.xlu0 %690, %v665
        %v692 = vpop.permute.xlu0 %691
        %695 = vset.pattern.permute.xlu0 0
        %696 = vperm.xlu0 %695, %v666
        %v697 = vpop.permute.xlu0 %696
        %v699 = vsub.f32 %v415, %v682
        %v700 = vsub.f32 %v491, %v687
        %v701 = vsub.f32 %v567, %v692
        %v702 = vsub.f32 %v643, %v697
        %v703 = vmul.f32 %v699, 1.442695
        %v704 = vpow.pop %v703
        %v705 = vmul.f32 %v700, 1.442695
        %v706 = vpow.pop %v705
        %v707 = vmul.f32 %v701, 1.442695
        %v708 = vpow.pop %v707
        %v709 = vmul.f32 %v702, 1.442695
        %v710 = vpow.pop %v709
        %v711 = vld [vmem:[#allocation3] sm:$0xff]
        %v712 = vld [vmem:[#allocation3 + $0x8] sm:$0xff]
        %v713 = vld [vmem:[#allocation3 + $0x10] sm:$0xff]
        %v714 = vld [vmem:[#allocation3 + $0x18] sm:$0xff]
        %v715 = vmul.f32 %v672, %v711
        %v716 = vmul.f32 %v674, %v712
        %v717 = vmul.f32 %v676, %v713
        %v718 = vmul.f32 %v678, %v714
        %v719 = vsel %vm650, %v704, 0.0
        %720 = vadd.xlane.f32.xlu0 %v719
        %v721 = vpop.xlane.xlu0 %720
        %v722 = vsel %vm650, %v706, 0.0
        %723 = vadd.xlane.f32.xlu0 %v722
        %v724 = vpop.xlane.xlu0 %723
        %v725 = vsel %vm650, %v708, 0.0
        %726 = vadd.xlane.f32.xlu0 %v725
        %v727 = vpop.xlane.xlu0 %726
        %v728 = vsel %vm650, %v710, 0.0
        %729 = vadd.xlane.f32.xlu0 %v728
        %v730 = vpop.xlane.xlu0 %729
        %v731 = vadd.f32 %v715, %v721
        %v732 = vadd.f32 %v716, %v724
        %v733 = vadd.f32 %v717, %v727
        %v734 = vadd.f32 %v718, %v730
        %vm735 = vcmask 7168
        %736 = vst.msk [vmem:[#allocation3] sm:$0xff] %vm735, %v731
        %737 = vst.msk [vmem:[#allocation3 + $0x8] sm:$0xff] %vm735, %v732
        %738 = vst.msk [vmem:[#allocation3 + $0x10] sm:$0xff] %vm735, %v733
        %739 = vst.msk [vmem:[#allocation3 + $0x18] sm:$0xff] %vm735, %v734
        %v741 = vsel %vm650, %v704, 0
        %743 = vmatprep.subr.mxu0 0.0
        %744 = vmatpush1.msra.mxu0 0.0
        %745 = vmatprep.subr.mxu0 0.0
        %746 = vmatpush1.msra.mxu0 0.0
        %747 = vmatprep.subr.mxu0 0.0
        %748 = vmatpush1.msra.mxu0 0.0
        %749 = vmatprep.subr.mxu0 0.0
        %750 = vmatpush1.msra.mxu0 0.0
        %751 = vmatprep.subr.mxu0 0.0
        %752 = vmatpush1.msra.mxu0 0.0
        %753 = vmatprep.subr.mxu0 0.0
        %754 = vmatpush1.msra.mxu0 0.0
        %755 = vmatprep.subr.mxu0 0.0
        %756 = vmatpush1.msra.mxu0 0.0
        %757 = vmatprep.subr.mxu0 0.0
        %758 = vmatpush1.msra.mxu0 0.0
        %759 = vmatprep.subr.mxu0 0.0
        %760 = vmatpush1.msra.mxu0 0.0
        %761 = vmatprep.subr.mxu0 0.0
        %762 = vmatpush1.msra.mxu0 0.0
        %763 = vmatprep.subr.mxu0 0.0
        %764 = vmatpush1.msra.mxu0 0.0
        %765 = vmatprep.subr.mxu0 0.0
        %766 = vmatpush1.msra.mxu0 0.0
        %767 = vmatprep.subr.mxu0 0.0
        %768 = vmatpush1.msra.mxu0 0.0
        %769 = vmatprep.subr.mxu0 0.0
        %770 = vmatpush1.msra.mxu0 0.0
        %771 = vmatprep.subr.mxu0 0.0
        %772 = vmatpush1.msra.mxu0 0.0
        %773 = vmatprep.subr.mxu0 0.0
        %774 = vmatpush1.msra.mxu0 %v337
        %775 = vmatprep.subr.mxu0 0.0
        %776 = vmatpush2.msra.mxu0 0.0
        %777 = vmatprep.subr.mxu0 0.0
        %778 = vmatpush2.msra.mxu0 0.0
        %779 = vmatprep.subr.mxu0 0.0
        %780 = vmatpush2.msra.mxu0 0.0
        %781 = vmatprep.subr.mxu0 0.0
        %782 = vmatpush2.msra.mxu0 0.0
        %783 = vmatprep.subr.mxu0 0.0
        %784 = vmatpush2.msra.mxu0 0.0
        %785 = vmatprep.subr.mxu0 0.0
        %786 = vmatpush2.msra.mxu0 0.0
        %787 = vmatprep.subr.mxu0 0.0
        %788 = vmatpush2.msra.mxu0 0.0
        %789 = vmatprep.subr.mxu0 0.0
        %790 = vmatpush2.msra.mxu0 0.0
        %791 = vmatprep.subr.mxu0 0.0
        %792 = vmatpush2.msra.mxu0 0.0
        %793 = vmatprep.subr.mxu0 0.0
        %794 = vmatpush2.msra.mxu0 0.0
        %795 = vmatprep.subr.mxu0 0.0
        %796 = vmatpush2.msra.mxu0 0.0
        %797 = vmatprep.subr.mxu0 0.0
        %798 = vmatpush2.msra.mxu0 0.0
        %799 = vmatprep.subr.mxu0 0.0
        %800 = vmatpush2.msra.mxu0 0.0
        %801 = vmatprep.subr.mxu0 0.0
        %802 = vmatpush2.msra.mxu0 0.0
        %803 = vmatprep.subr.mxu0 0.0
        %804 = vmatpush2.msra.mxu0 0.0
        %805 = vmatprep.subr.mxu0 0.0
        %806 = vmatpush2.msra.mxu0 0.0
        %807 = vmatprep.mubr.f32.mxu0 0.0
        %808 = vmatmul.mubr.f32.gmra.mxu0 %v741
        %v809 = vpop.f32.mrf.mxu0
        %v810 = vadd.f32 0.0, %v809
        %v811 = vpop.f32.mrf.mxu0
        %812 = vdwg.mxu0
        %v814 = vsel %vm650, %v706, 0
        %816 = vmatprep.subr.mxu0 0.0
        %817 = vmatpush1.msra.mxu0 0.0
        %818 = vmatprep.subr.mxu0 0.0
        %819 = vmatpush1.msra.mxu0 0.0
        %820 = vmatprep.subr.mxu0 0.0
        %821 = vmatpush1.msra.mxu0 0.0
        %822 = vmatprep.subr.mxu0 0.0
        %823 = vmatpush1.msra.mxu0 0.0
        %824 = vmatprep.subr.mxu0 0.0
        %825 = vmatpush1.msra.mxu0 0.0
        %826 = vmatprep.subr.mxu0 0.0
        %827 = vmatpush1.msra.mxu0 0.0
        %828 = vmatprep.subr.mxu0 0.0
        %829 = vmatpush1.msra.mxu0 0.0
        %830 = vmatprep.subr.mxu0 0.0
        %831 = vmatpush1.msra.mxu0 0.0
        %832 = vmatprep.subr.mxu0 0.0
        %833 = vmatpush1.msra.mxu0 0.0
        %834 = vmatprep.subr.mxu0 0.0
        %835 = vmatpush1.msra.mxu0 0.0
        %836 = vmatprep.subr.mxu0 0.0
        %837 = vmatpush1.msra.mxu0 0.0
        %838 = vmatprep.subr.mxu0 0.0
        %839 = vmatpush1.msra.mxu0 0.0
        %840 = vmatprep.subr.mxu0 0.0
        %841 = vmatpush1.msra.mxu0 0.0
        %842 = vmatprep.subr.mxu0 0.0
        %843 = vmatpush1.msra.mxu0 0.0
        %844 = vmatprep.subr.mxu0 0.0
        %845 = vmatpush1.msra.mxu0 0.0
        %846 = vmatprep.subr.mxu0 0.0
        %847 = vmatpush1.msra.mxu0 %v338
        %848 = vmatprep.subr.mxu0 0.0
        %849 = vmatpush2.msra.mxu0 0.0
        %850 = vmatprep.subr.mxu0 0.0
        %851 = vmatpush2.msra.mxu0 0.0
        %852 = vmatprep.subr.mxu0 0.0
        %853 = vmatpush2.msra.mxu0 0.0
        %854 = vmatprep.subr.mxu0 0.0
        %855 = vmatpush2.msra.mxu0 0.0
        %856 = vmatprep.subr.mxu0 0.0
        %857 = vmatpush2.msra.mxu0 0.0
        %858 = vmatprep.subr.mxu0 0.0
        %859 = vmatpush2.msra.mxu0 0.0
        %860 = vmatprep.subr.mxu0 0.0
        %861 = vmatpush2.msra.mxu0 0.0
        %862 = vmatprep.subr.mxu0 0.0
        %863 = vmatpush2.msra.mxu0 0.0
        %864 = vmatprep.subr.mxu0 0.0
        %865 = vmatpush2.msra.mxu0 0.0
        %866 = vmatprep.subr.mxu0 0.0
        %867 = vmatpush2.msra.mxu0 0.0
        %868 = vmatprep.subr.mxu0 0.0
        %869 = vmatpush2.msra.mxu0 0.0
        %870 = vmatprep.subr.mxu0 0.0
        %871 = vmatpush2.msra.mxu0 0.0
        %872 = vmatprep.subr.mxu0 0.0
        %873 = vmatpush2.msra.mxu0 0.0
        %874 = vmatprep.subr.mxu0 0.0
        %875 = vmatpush2.msra.mxu0 0.0
        %876 = vmatprep.subr.mxu0 0.0
        %877 = vmatpush2.msra.mxu0 0.0
        %878 = vmatprep.subr.mxu0 0.0
        %879 = vmatpush2.msra.mxu0 0.0
        %880 = vmatprep.mubr.f32.mxu0 0.0
        %881 = vmatmul.mubr.f32.gmra.mxu0 %v814
        %v882 = vpop.f32.mrf.mxu0
        %v883 = vadd.f32 0.0, %v882
        %v884 = vpop.f32.mrf.mxu0
        %885 = vdwg.mxu0
        %v887 = vsel %vm650, %v708, 0
        %889 = vmatprep.subr.mxu0 0.0
        %890 = vmatpush1.msra.mxu0 0.0
        %891 = vmatprep.subr.mxu0 0.0
        %892 = vmatpush1.msra.mxu0 0.0
        %893 = vmatprep.subr.mxu0 0.0
        %894 = vmatpush1.msra.mxu0 0.0
        %895 = vmatprep.subr.mxu0 0.0
        %896 = vmatpush1.msra.mxu0 0.0
        %897 = vmatprep.subr.mxu0 0.0
        %898 = vmatpush1.msra.mxu0 0.0
        %899 = vmatprep.subr.mxu0 0.0
        %900 = vmatpush1.msra.mxu0 0.0
        %901 = vmatprep.subr.mxu0 0.0
        %902 = vmatpush1.msra.mxu0 0.0
        %903 = vmatprep.subr.mxu0 0.0
        %904 = vmatpush1.msra.mxu0 0.0
        %905 = vmatprep.subr.mxu0 0.0
        %906 = vmatpush1.msra.mxu0 0.0
        %907 = vmatprep.subr.mxu0 0.0
        %908 = vmatpush1.msra.mxu0 0.0
        %909 = vmatprep.subr.mxu0 0.0
        %910 = vmatpush1.msra.mxu0 0.0
        %911 = vmatprep.subr.mxu0 0.0
        %912 = vmatpush1.msra.mxu0 0.0
        %913 = vmatprep.subr.mxu0 0.0
        %914 = vmatpush1.msra.mxu0 0.0
        %915 = vmatprep.subr.mxu0 0.0
        %916 = vmatpush1.msra.mxu0 0.0
        %917 = vmatprep.subr.mxu0 0.0
        %918 = vmatpush1.msra.mxu0 0.0
        %919 = vmatprep.subr.mxu0 0.0
        %920 = vmatpush1.msra.mxu0 %v339
        %921 = vmatprep.subr.mxu0 0.0
        %922 = vmatpush2.msra.mxu0 0.0
        %923 = vmatprep.subr.mxu0 0.0
        %924 = vmatpush2.msra.mxu0 0.0
        %925 = vmatprep.subr.mxu0 0.0
        %926 = vmatpush2.msra.mxu0 0.0
        %927 = vmatprep.subr.mxu0 0.0
        %928 = vmatpush2.msra.mxu0 0.0
        %929 = vmatprep.subr.mxu0 0.0
        %930 = vmatpush2.msra.mxu0 0.0
        %931 = vmatprep.subr.mxu0 0.0
        %932 = vmatpush2.msra.mxu0 0.0
        %933 = vmatprep.subr.mxu0 0.0
        %934 = vmatpush2.msra.mxu0 0.0
        %935 = vmatprep.subr.mxu0 0.0
        %936 = vmatpush2.msra.mxu0 0.0
        %937 = vmatprep.subr.mxu0 0.0
        %938 = vmatpush2.msra.mxu0 0.0
        %939 = vmatprep.subr.mxu0 0.0
        %940 = vmatpush2.msra.mxu0 0.0
        %941 = vmatprep.subr.mxu0 0.0
        %942 = vmatpush2.msra.mxu0 0.0
        %943 = vmatprep.subr.mxu0 0.0
        %944 = vmatpush2.msra.mxu0 0.0
        %945 = vmatprep.subr.mxu0 0.0
        %946 = vmatpush2.msra.mxu0 0.0
        %947 = vmatprep.subr.mxu0 0.0
        %948 = vmatpush2.msra.mxu0 0.0
        %949 = vmatprep.subr.mxu0 0.0
        %950 = vmatpush2.msra.mxu0 0.0
        %951 = vmatprep.subr.mxu0 0.0
        %952 = vmatpush2.msra.mxu0 0.0
        %953 = vmatprep.mubr.f32.mxu0 0.0
        %954 = vmatmul.mubr.f32.gmra.mxu0 %v887
        %v955 = vpop.f32.mrf.mxu0
        %v956 = vadd.f32 0.0, %v955
        %v957 = vpop.f32.mrf.mxu0
        %958 = vdwg.mxu0
        %v960 = vsel %vm650, %v710, 0
        %962 = vmatprep.subr.mxu0 0.0
        %963 = vmatpush1.msra.mxu0 0.0
        %964 = vmatprep.subr.mxu0 0.0
        %965 = vmatpush1.msra.mxu0 0.0
        %966 = vmatprep.subr.mxu0 0.0
        %967 = vmatpush1.msra.mxu0 0.0
        %968 = vmatprep.subr.mxu0 0.0
        %969 = vmatpush1.msra.mxu0 0.0
        %970 = vmatprep.subr.mxu0 0.0
        %971 = vmatpush1.msra.mxu0 0.0
        %972 = vmatprep.subr.mxu0 0.0
        %973 = vmatpush1.msra.mxu0 0.0
        %974 = vmatprep.subr.mxu0 0.0
        %975 = vmatpush1.msra.mxu0 0.0
        %976 = vmatprep.subr.mxu0 0.0
        %977 = vmatpush1.msra.mxu0 0.0
        %978 = vmatprep.subr.mxu0 0.0
        %979 = vmatpush1.msra.mxu0 0.0
        %980 = vmatprep.subr.mxu0 0.0
        %981 = vmatpush1.msra.mxu0 0.0
        %982 = vmatprep.subr.mxu0 0.0
        %983 = vmatpush1.msra.mxu0 0.0
        %984 = vmatprep.subr.mxu0 0.0
        %985 = vmatpush1.msra.mxu0 0.0
        %986 = vmatprep.subr.mxu0 0.0
        %987 = vmatpush1.msra.mxu0 0.0
        %988 = vmatprep.subr.mxu0 0.0
        %989 = vmatpush1.msra.mxu0 0.0
        %990 = vmatprep.subr.mxu0 0.0
        %991 = vmatpush1.msra.mxu0 0.0
        %992 = vmatprep.subr.mxu0 0.0
        %993 = vmatpush1.msra.mxu0 %v340
        %994 = vmatprep.subr.mxu0 0.0
        %995 = vmatpush2.msra.mxu0 0.0
        %996 = vmatprep.subr.mxu0 0.0
        %997 = vmatpush2.msra.mxu0 0.0
        %998 = vmatprep.subr.mxu0 0.0
        %999 = vmatpush2.msra.mxu0 0.0
        %1000 = vmatprep.subr.mxu0 0.0
        %1001 = vmatpush2.msra.mxu0 0.0
        %1002 = vmatprep.subr.mxu0 0.0
        %1003 = vmatpush2.msra.mxu0 0.0
        %1004 = vmatprep.subr.mxu0 0.0
        %1005 = vmatpush2.msra.mxu0 0.0
        %1006 = vmatprep.subr.mxu0 0.0
        %1007 = vmatpush2.msra.mxu0 0.0
        %1008 = vmatprep.subr.mxu0 0.0
        %1009 = vmatpush2.msra.mxu0 0.0
        %1010 = vmatprep.subr.mxu0 0.0
        %1011 = vmatpush2.msra.mxu0 0.0
        %1012 = vmatprep.subr.mxu0 0.0
        %1013 = vmatpush2.msra.mxu0 0.0
        %1014 = vmatprep.subr.mxu0 0.0
        %1015 = vmatpush2.msra.mxu0 0.0
        %1016 = vmatprep.subr.mxu0 0.0
        %1017 = vmatpush2.msra.mxu0 0.0
        %1018 = vmatprep.subr.mxu0 0.0
        %1019 = vmatpush2.msra.mxu0 0.0
        %1020 = vmatprep.subr.mxu0 0.0
        %1021 = vmatpush2.msra.mxu0 0.0
        %1022 = vmatprep.subr.mxu0 0.0
        %1023 = vmatpush2.msra.mxu0 0.0
        %1024 = vmatprep.subr.mxu0 0.0
        %1025 = vmatpush2.msra.mxu0 0.0
        %1026 = vmatprep.mubr.f32.mxu0 0.0
        %1027 = vmatmul.mubr.f32.gmra.mxu0 %v960
        %v1028 = vpop.f32.mrf.mxu0
        %v1029 = vadd.f32 0.0, %v1028
        %v1030 = vpop.f32.mrf.mxu0
        %1031 = vdwg.mxu0
        %v1032 = vld [vmem:[#allocation4] sm:$0xff]
        %v1033 = vld [vmem:[#allocation4 + $0x8] sm:$0xff]
        %v1034 = vld [vmem:[#allocation4 + $0x10] sm:$0xff]
        %v1035 = vld [vmem:[#allocation4 + $0x18] sm:$0xff]
        %1037 = vset.pattern.permute.xlu0 0
        %1038 = vperm.xlu0 %1037, %v672
        %v1039 = vpop.permute.xlu0 %1038
        %1042 = vset.pattern.permute.xlu0 0
        %1043 = vperm.xlu0 %1042, %v674
        %v1044 = vpop.permute.xlu0 %1043
        %1047 = vset.pattern.permute.xlu0 0
        %1048 = vperm.xlu0 %1047, %v676
        %v1049 = vpop.permute.xlu0 %1048
        %1052 = vset.pattern.permute.xlu0 0
        %1053 = vperm.xlu0 %1052, %v678
        %v1054 = vpop.permute.xlu0 %1053
        %v1056 = vmul.f32 %v1039, %v1032
        %v1057 = vmul.f32 %v1044, %v1033
        %v1058 = vmul.f32 %v1049, %v1034
        %v1059 = vmul.f32 %v1054, %v1035
        %v1060 = vadd.f32 %v1056, %v810
        %v1061 = vadd.f32 %v1057, %v883
        %v1062 = vadd.f32 %v1058, %v956
        %v1063 = vadd.f32 %v1059, %v1029
        %1064 = vst.msk [vmem:[#allocation4] sm:$0xff] %vm341, %v1060
        %1065 = vst.msk [vmem:[#allocation4 + $0x8] sm:$0xff] %vm341, %v1061
        %1066 = vst.msk [vmem:[#allocation4 + $0x10] sm:$0xff] %vm341, %v1062
        %1067 = vst.msk [vmem:[#allocation4 + $0x18] sm:$0xff] %vm341, %v1063
        %1068 = vst.msk [vmem:[#allocation2] sm:$0xff] %vm735, %v663
        %1069 = vst.msk [vmem:[#allocation2 + $0x8] sm:$0xff] %vm735, %v664
        %1070 = vst.msk [vmem:[#allocation2 + $0x10] sm:$0xff] %vm735, %v665
        %1071 = vst.msk [vmem:[#allocation2 + $0x18] sm:$0xff] %vm735, %v666
        // Predicated region
        $region49: #{tpu_custom_call.1} parent=31 // pred_check
          %p1072 = pneg %p299
        $region50: #{tpu_custom_call.1} parent=31 // pred_check_branch
          %1074 = sbr.rel (%p1072) target = $region52
        $region51: #{tpu_custom_call.1} parent=31 // pred_region
          %v1075 = vld [vmem:[#allocation3] sm:$0xff]
          %v1076 = vld [vmem:[#allocation3 + $0x8] sm:$0xff]
          %v1077 = vld [vmem:[#allocation3 + $0x10] sm:$0xff]
          %v1078 = vld [vmem:[#allocation3 + $0x18] sm:$0xff]
          %v1079 = vrcp.pop %v1075
          %v1080 = vmul.f32 1.0, %v1079
          %v1081 = vrcp.pop %v1076
          %v1082 = vmul.f32 1.0, %v1081
          %v1083 = vrcp.pop %v1077
          %v1084 = vmul.f32 1.0, %v1083
          %v1085 = vrcp.pop %v1078
          %v1086 = vmul.f32 1.0, %v1085
          %v1087 = vld [vmem:[#allocation4] sm:$0xff]
          %v1088 = vld [vmem:[#allocation4 + $0x8] sm:$0xff]
          %v1089 = vld [vmem:[#allocation4 + $0x10] sm:$0xff]
          %v1090 = vld [vmem:[#allocation4 + $0x18] sm:$0xff]
          %1092 = vset.pattern.permute.xlu0 0
          %1093 = vperm.xlu0 %1092, %v1080
          %v1094 = vpop.permute.xlu0 %1093
          %1097 = vset.pattern.permute.xlu0 0
          %1098 = vperm.xlu0 %1097, %v1082
          %v1099 = vpop.permute.xlu0 %1098
          %1102 = vset.pattern.permute.xlu0 0
          %1103 = vperm.xlu0 %1102, %v1084
          %v1104 = vpop.permute.xlu0 %1103
          %1107 = vset.pattern.permute.xlu0 0
          %1108 = vperm.xlu0 %1107, %v1086
          %v1109 = vpop.permute.xlu0 %1108
          %v1111 = vmul.f32 %v1087, %v1094
          %v1112 = vmul.f32 %v1088, %v1099
          %v1113 = vmul.f32 %v1089, %v1104
          %v1114 = vmul.f32 %v1090, %v1109
          %1115 = vst.msk [vmem:[%s295] sm:$0xff] %vm341, %v1111
          %1117 = vrot.lane.b32.xlu0 %v1112, 32
          %v1118 = vpop.permute.xlu0 %1117
          %vm1120 = vcmask 523520
          %1121 = vst.msk [vmem:[%s295] sm:$0xff] %vm1120, %v1118
          %1123 = vrot.lane.b32.xlu0 %v1113, 64
          %v1124 = vpop.permute.xlu0 %1123
          %vm1126 = vcmask 785920
          %1127 = vst.msk [vmem:[%s295] sm:$0xff] %vm1126, %v1124
          %1129 = vrot.lane.b32.xlu0 %v1114, 96
          %v1130 = vpop.permute.xlu0 %1129
          %vm1132 = vcmask 1048320
          %1133 = vst.msk [vmem:[%s295] sm:$0xff] %vm1132, %v1130
        $region52: #{tpu_custom_call.1} parent=31 // pred_fallthru
          _
        %s1134 = sand.u32 %s136, 1
        %s1135 = scalar_lea.sflag [#allocation8], %s1134
        %s1136 = sand.u32 %s136, 1
        %s1137 = smul.addr %s1136, 8
        %s1138 = scalar_lea.vmem [#allocation12], %s1137
        // Predicated region
        $region53: #{tpu_custom_call.1} parent=31 // pred_check
          %p1139 = pneg %p146
        $region54: #{tpu_custom_call.1} parent=31 // pred_check_branch
          %1141 = sbr.rel (%p1139) target = $region56
        $region55: #{tpu_custom_call.1} parent=31 // pred_region
          %s1143 = ssub.s32 128, 128
          %1144 = vsyncadd %s1135, %s1143
          %s1145 = sadd.s32 %s29, %s28
          %s1146 = smul.addr %s1145, 128
          %s1147 = scalar_lea.hbm %s3, %s1146
          %s1149 = sshll.u32 %s1138, 4
          %s1150 = int_to_ptr.vmem [resolvable:$true] %s1149
          %1152 = dma.vmem_to_hbm [thread:$0]  %s1150, 128, %s1147, %s1135
        $region56: #{tpu_custom_call.1} parent=31 // pred_fallthru
          _
      $region32: #{tpu_custom_call.1} parent=5 // pred_fallthru
        _
      %p1153 = scmp.le.s32.totalorder 2, %s18
      // Predicated region
      $region57: #{tpu_custom_call.1} parent=5 // pred_check
        %p1154 = pneg %p1153
      $region58: #{tpu_custom_call.1} parent=5 // pred_check_branch
        %1156 = sbr.rel (%p1154) target = $region60
      $region59: #{tpu_custom_call.1} parent=5 // pred_region
        %s1157 = ssub.s32 %s18, 2
        // Predicated region
        $region61: #{tpu_custom_call.1} parent=59 // pred_check
          %p1158 = pneg %p152
        $region62: #{tpu_custom_call.1} parent=59 // pred_check_branch
          %1160 = sbr.rel (%p1158) target = $region64
        $region63: #{tpu_custom_call.1} parent=59 // pred_region
          %s1161 = sand.u32 %s137, 1
          %s1162 = scalar_lea.sflag [#allocation8], %s1161
          %s1163 = sand.u32 %s137, 1
          %s1164 = smul.addr %s1163, 8
          %s1165 = scalar_lea.vmem [#allocation12], %s1164
          %1166 = dma.done %s1162, 128
        $region64: #{tpu_custom_call.1} parent=59 // pred_fallthru
          _
      $region60: #{tpu_custom_call.1} parent=5 // pred_fallthru
        _
    $region6: #{tpu_custom_call.1} parent=1 // loop_footer
      %s22 = sadd.s32 1, %s18
    $region7: #{tpu_custom_call.1} parent=1 // loop_footer_branch
      %17 = sbr.rel target = $region3
    $region8: #{tpu_custom_call.1} parent=1 // loop_exit
      _
    %1167 = vsyncpa [#allocation7], 1
    %s1168 = scalar_lea.sflag [#allocation7], 1
    %1169 = vsyncpa %s1168, 1
    %1170 = vsyncpa [#allocation10], 1
    %s1171 = scalar_lea.sflag [#allocation10], 1
    %1172 = vsyncpa %s1171, 1
    %1173 = vsyncpa [#allocation8], 1
    %s1174 = scalar_lea.sflag [#allocation8], 1
    %1175 = vsyncpa %s1174, 1

</llo_original>
